<compile_context>
chip_gen: v6e
topology: v6e:2x2x1
jax: 0.10.0
libtpu: 0.0.40
codegen_flags: <defaults>
</compile_context>

<pallas_src>
import functools

import jax
import jax.numpy as jnp
from jax import lax
from jax.experimental import pallas as pl
from jax.experimental.pallas import tpu as pltpu


# ----------------------------------------------------------------------------
# Pallas kernel: fused 3x3 conv (SAME, stride 1) + bias + SiLU, NCHW layout
# ----------------------------------------------------------------------------
def _repconv_kernel(x_ref, w_ref, b_ref, o_ref, *, H, W):
    # x_ref : (1, Cin, H*W)    one batch element, spatial dims flattened on lanes
    # w_ref : (9, Cout, Cin)   fused weight, leading dim is the tap index kh*3+kw
    # b_ref : (Cout, 1)        fused bias
    # o_ref : (1, Cout, H*W)
    Cin = x_ref.shape[1]
    Cout = o_ref.shape[1]
    HW = H * W

    x = x_ref[0]                                               # (Cin, H*W)

    # Border predicates for the implicit SAME zero padding — computed once on
    # the flattened output index and reused by all nine taps.
    pos = lax.broadcasted_iota(jnp.int32, (1, HW), 1)          # flattened index
    col = pos % W                                              # column index
    row_ok = {-1: pos >= W, 0: None, 1: pos < (H - 1) * W}     # source row in [0,H)
    col_ok = {-1: col >= 1, 0: None, 1: col < (W - 1)}         # source col in [0,W)

    # Accumulator starts at the broadcast bias; each tap adds one K=Cin MXU
    # matmul.  tap[cin, p] = x[cin, p + dh*W + dw], zero outside the image
    # (dh = kh-1, dw = kw-1).  f32 operands/accumulation for exactness
    # (op is HBM-bound at these channel counts, bf16 would not help).
    acc = jnp.broadcast_to(b_ref[...], (Cout, HW))             # (Cout, H*W) f32
    for kh in range(3):
        for kw in range(3):
            dh, dw = kh - 1, kw - 1
            shift = (-(dh * W + dw)) % HW                      # static int
            tap = x if shift == 0 else pltpu.roll(x, shift=shift, axis=1)
            valid = row_ok[dh]
            c = col_ok[dw]
            if c is not None:
                valid = c if valid is None else (valid & c)
            if valid is not None:
                tap = jnp.where(valid, tap, 0.0)
            acc = acc + jnp.dot(w_ref[kh * 3 + kw], tap,
                                preferred_element_type=jnp.float32)

    o_ref[0] = (acc * jax.nn.sigmoid(acc)).astype(o_ref.dtype)  # SiLU


def repconv_pallas(x_nchw, k_oihw, bias):
    """x_nchw: (N, Cin, H, W) f32; k_oihw: (Cout, Cin, 3, 3); bias: (Cout,)."""
    N, Cin, H, W = x_nchw.shape
    Cout = k_oihw.shape[0]
    HW = H * W

    x_flat = x_nchw.reshape(N, Cin, HW)                        # free (contiguous)
    # (Cout, Cin, 3, 3) -> (kh*3+kw, Cout, Cin); tiny weight-only relayout.
    w9 = jnp.transpose(k_oihw, (2, 3, 0, 1)).reshape(9, Cout, Cin)
    b2d = bias.reshape(Cout, 1)

    cost = pl.CostEstimate(
        flops=2 * N * HW * Cout * 9 * Cin + 4 * N * HW * Cout,
        transcendentals=N * HW * Cout,
        bytes_accessed=4 * (N * Cin * HW + N * Cout * HW + 9 * Cout * Cin + Cout),
    )

    kernel = functools.partial(_repconv_kernel, H=H, W=W)
    out_flat = pl.pallas_call(
        kernel,
        out_shape=jax.ShapeDtypeStruct((N, Cout, HW), jnp.float32),
        grid_spec=pltpu.PrefetchScalarGridSpec(
            num_scalar_prefetch=0,
            grid=(N,),
            in_specs=[
                pl.BlockSpec((1, Cin, HW), lambda n: (n, 0, 0)),
                pl.BlockSpec((9, Cout, Cin), lambda n: (0, 0, 0)),
                pl.BlockSpec((Cout, 1), lambda n: (0, 0)),
            ],
            out_specs=pl.BlockSpec((1, Cout, HW), lambda n: (n, 0, 0)),
        ),
        compiler_params=pltpu.CompilerParams(
            dimension_semantics=("parallel",)),
        cost_estimate=cost,
    )(x_flat, w9, b2d)
    # TODO(synk): for large H*W (e.g. 80x80 YOLO maps) add a spatial grid axis
    # over row bands (halo rows fetched via a pl.ANY ref + manual DMA) so the
    # per-step VMEM footprint stays within v7x's 64 MiB and both TensorCores
    # stay busy even for N=1.
    return out_flat.reshape(N, Cout, H, W)                     # free (contiguous)


# ----------------------------------------------------------------------------
# Parameter construction (deterministic) + BN folding (eval-mode running stats)
# ----------------------------------------------------------------------------
def _fuse_conv_bn(kernel_oihw, gamma, beta, mean, var, eps=1e-3):
    std = jnp.sqrt(var + eps)
    t = (gamma / std).reshape(-1, 1, 1, 1)
    return kernel_oihw * t, beta - mean * gamma / std


def make_repconv_params(key, c1, c2):
    """Builds the three RepConv branches and returns the equivalent fused
    (kernel OIHW, bias) — same math as RepConv.get_equivalent_kernel_bias()."""
    ks = jax.random.split(key, 10)

    def bn_params(k_g, k_b, k_m, k_v, c):
        gamma = 0.5 + jax.random.uniform(k_g, (c,), jnp.float32)
        beta = 0.1 * jax.random.normal(k_b, (c,), jnp.float32)
        mean = 0.1 * jax.random.normal(k_m, (c,), jnp.float32)
        var = 0.5 + jax.random.uniform(k_v, (c,), jnp.float32)
        return gamma, beta, mean, var

    # rbr_dense: Conv2d(c1, c2, 3, bias=False) + BN(c2)
    w3 = 0.1 * jax.random.normal(ks[0], (c2, c1, 3, 3), jnp.float32)
    k3, b3 = _fuse_conv_bn(w3, *bn_params(ks[1], ks[2], ks[3], ks[4], c2))

    # rbr_1x1: Conv2d(c1, c2, 1, bias=False) + BN(c2), padded 1x1 -> 3x3
    w1 = 0.1 * jax.random.normal(ks[5], (c2, c1, 1, 1), jnp.float32)
    k1, b1 = _fuse_conv_bn(w1, *bn_params(ks[6], ks[7], ks[8], ks[9], c2))
    k1_33 = jnp.pad(k1, ((0, 0), (0, 0), (1, 1), (1, 1)))

    # rbr_identity: BN(c1), only when c1 == c2 and stride == 1 (groups == 1)
    if c1 == c2:
        kid = jnp.zeros((c1, c1, 3, 3), jnp.float32)
        kid = kid.at[jnp.arange(c1), jnp.arange(c1), 1, 1].set(1.0)
        bnid = bn_params(*jax.random.split(jax.random.fold_in(key, 7), 4), c1)
        kid, bid = _fuse_conv_bn(kid, *bnid)
    else:
        kid, bid = 0.0, 0.0

    return k3 + k1_33 + kid, b3 + b1 + bid                     # OIHW, (Cout,)


# ----------------------------------------------------------------------------
# Reference (plain JAX) for verification
# ----------------------------------------------------------------------------
def repconv_reference(x_nchw, k_oihw, bias):
    y = lax.conv_general_dilated(
        x_nchw, k_oihw, window_strides=(1, 1), padding="SAME",
        dimension_numbers=("NCHW", "OIHW", "NCHW"))
    y = y + bias.reshape(1, -1, 1, 1)
    return y * jax.nn.sigmoid(y)


if __name__ == "__main__":
    N, C1, C2, H, W = 2, 4, 4, 16, 16
    key = jax.random.PRNGKey(0)
    kx, kp = jax.random.split(key)

    x = jax.random.normal(kx, (N, C1, H, W), jnp.float32)
    k_oihw, bias = make_repconv_params(kp, C1, C2)

    out = jax.block_until_ready(repconv_pallas(x, k_oihw, bias))

    ref = repconv_reference(x, k_oihw, bias)
    assert out.shape == (N, C2, H, W)
    assert jnp.allclose(out, ref, atol=1e-4, rtol=1e-4), "mismatch vs reference"

    print("KERNEL_OK")
</pallas_src>

<mosaic_0001>
module attributes {stable_mosaic.version = 11 : i64} {
  func.func @_repconv_kernel(%arg0: i32, %arg1: memref<1x4x256xf32, #tpu.memory_space<vmem>>, %arg2: memref<9x4x4xf32, #tpu.memory_space<vmem>>, %arg3: memref<4x1xf32, #tpu.memory_space<vmem>>, %arg4: memref<1x4x256xf32, #tpu.memory_space<vmem>>) attributes {dimension_semantics = [#tpu.dimension_semantics<parallel>], iteration_bounds = array<i64: 2>, scalar_prefetch = 0 : i64, scratch_operands = 0 : i64, tpu.core_type = #tpu.core_type<tc>, window_params = [{transform_indices = @transform_0, window_bounds = array<i64: 1, 4, 256>}, {pipeline_mode = #tpu.pipeline_mode<synchronous>, transform_indices = @transform_1, window_bounds = array<i64: 9, 4, 4>}, {pipeline_mode = #tpu.pipeline_mode<synchronous>, transform_indices = @transform_2, window_bounds = array<i64: 4, 1>}, {transform_indices = @transform_3, window_bounds = array<i64: 1, 4, 256>}]} {
    %c0 = arith.constant 0 : index
    %c0_0 = arith.constant 0 : index
    %c0_1 = arith.constant 0 : index
    %0 = vector.load %arg1[%c0, %c0_0, %c0_1] : memref<1x4x256xf32, #tpu.memory_space<vmem>>, vector<1x4x256xf32>
    %1 = vector.shape_cast %0 : vector<1x4x256xf32> to vector<4x256xf32>
    %2 = tpu.iota {dimensions = array<i32: 1>} : vector<1x256xi32>
    %c16_i32 = arith.constant 16 : i32
    %c0_i32 = arith.constant 0 : i32
    %3 = arith.cmpi eq, %c16_i32, %c0_i32 : i32
    %c1_i32 = arith.constant 1 : i32
    %4 = arith.select %3, %c1_i32, %c16_i32 : i32
    %5 = vector.broadcast %4 : i32 to vector<1x256xi32>
    %6 = arith.remsi %2, %5 : vector<1x256xi32>
    %c0_i32_2 = arith.constant 0 : i32
    %7 = vector.broadcast %c0_i32_2 : i32 to vector<1x256xi32>
    %8 = arith.cmpi ne, %6, %7 : vector<1x256xi32>
    %c0_i32_3 = arith.constant 0 : i32
    %9 = vector.broadcast %c0_i32_3 : i32 to vector<1x256xi32>
    %10 = arith.cmpi slt, %6, %9 : vector<1x256xi32>
    %c0_i32_4 = arith.constant 0 : i32
    %11 = arith.cmpi slt, %4, %c0_i32_4 : i32
    %12 = vector.broadcast %11 : i1 to vector<1x256xi1>
    %13 = vector.broadcast %12 : vector<1x256xi1> to vector<1x256xi1>
    %14 = arith.xori %10, %13 : vector<1x256xi1>
    %15 = arith.andi %14, %8 : vector<1x256xi1>
    %16 = vector.broadcast %4 : i32 to vector<1x256xi32>
    %17 = arith.addi %6, %16 : vector<1x256xi32>
    %18 = arith.select %15, %17, %6 : vector<1x256xi1>, vector<1x256xi32>
    %c16_i32_5 = arith.constant 16 : i32
    %19 = vector.broadcast %c16_i32_5 : i32 to vector<1x256xi32>
    %20 = arith.cmpi sge, %2, %19 : vector<1x256xi32>
    %c240_i32 = arith.constant 240 : i32
    %21 = vector.broadcast %c240_i32 : i32 to vector<1x256xi32>
    %22 = arith.cmpi slt, %2, %21 : vector<1x256xi32>
    %c1_i32_6 = arith.constant 1 : i32
    %23 = vector.broadcast %c1_i32_6 : i32 to vector<1x256xi32>
    %24 = arith.cmpi sge, %18, %23 : vector<1x256xi32>
    %c15_i32 = arith.constant 15 : i32
    %25 = vector.broadcast %c15_i32 : i32 to vector<1x256xi32>
    %26 = arith.cmpi slt, %18, %25 : vector<1x256xi32>
    %c0_7 = arith.constant 0 : index
    %c0_8 = arith.constant 0 : index
    %27 = vector.load %arg3[%c0_7, %c0_8] : memref<4x1xf32, #tpu.memory_space<vmem>>, vector<4x1xf32>
    %28 = vector.shape_cast %27 : vector<4x1xf32> to vector<4x1xf32>
    %29 = vector.broadcast %28 : vector<4x1xf32> to vector<4x256xf32>
    %c17_i32 = arith.constant 17 : i32
    %30 = tpu.dynamic_rotate %1 by %c17_i32 dim 1 : vector<4x256xf32>, i32 -> vector<4x256xf32>
    %31 = arith.andi %20, %24 : vector<1x256xi1>
    %cst = arith.constant 0.000000e+00 : f32
    %32 = vector.shape_cast %31 : vector<1x256xi1> to vector<1x256xi1>
    %33 = vector.broadcast %32 : vector<1x256xi1> to vector<4x256xi1>
    %34 = vector.broadcast %cst : f32 to vector<4x256xf32>
    %35 = arith.select %33, %30, %34 : vector<4x256xi1>, vector<4x256xf32>
    %c0_9 = arith.constant 0 : index
    %c0_10 = arith.constant 0 : index
    %c0_11 = arith.constant 0 : index
    %36 = vector.load %arg2[%c0_9, %c0_10, %c0_11] : memref<9x4x4xf32, #tpu.memory_space<vmem>>, vector<1x4x4xf32>
    %37 = vector.shape_cast %36 : vector<1x4x4xf32> to vector<4x4xf32>
    %cst_12 = arith.constant dense<0.000000e+00> : vector<4x256xf32>
    %38 = tpu.matmul %37, %35, %cst_12 {dimension_numbers = #tpu.dot_dimension_numbers<[1], [0], [0], [1], [0, 0, 1, 1], [], []>} : vector<4x4xf32>, vector<4x256xf32>, vector<4x256xf32> -> vector<4x256xf32>
    %39 = arith.addf %29, %38 : vector<4x256xf32>
    %c16_i32_13 = arith.constant 16 : i32
    %40 = tpu.dynamic_rotate %1 by %c16_i32_13 dim 1 : vector<4x256xf32>, i32 -> vector<4x256xf32>
    %cst_14 = arith.constant 0.000000e+00 : f32
    %41 = vector.shape_cast %20 : vector<1x256xi1> to vector<1x256xi1>
    %42 = vector.broadcast %41 : vector<1x256xi1> to vector<4x256xi1>
    %43 = vector.broadcast %cst_14 : f32 to vector<4x256xf32>
    %44 = arith.select %42, %40, %43 : vector<4x256xi1>, vector<4x256xf32>
    %c1 = arith.constant 1 : index
    %c0_15 = arith.constant 0 : index
    %c0_16 = arith.constant 0 : index
    %45 = vector.load %arg2[%c1, %c0_15, %c0_16] : memref<9x4x4xf32, #tpu.memory_space<vmem>>, vector<1x4x4xf32>
    %46 = vector.shape_cast %45 : vector<1x4x4xf32> to vector<4x4xf32>
    %cst_17 = arith.constant dense<0.000000e+00> : vector<4x256xf32>
    %47 = tpu.matmul %46, %44, %cst_17 {dimension_numbers = #tpu.dot_dimension_numbers<[1], [0], [0], [1], [0, 0, 1, 1], [], []>} : vector<4x4xf32>, vector<4x256xf32>, vector<4x256xf32> -> vector<4x256xf32>
    %48 = arith.addf %39, %47 : vector<4x256xf32>
    %c15_i32_18 = arith.constant 15 : i32
    %49 = tpu.dynamic_rotate %1 by %c15_i32_18 dim 1 : vector<4x256xf32>, i32 -> vector<4x256xf32>
    %50 = arith.andi %20, %26 : vector<1x256xi1>
    %cst_19 = arith.constant 0.000000e+00 : f32
    %51 = vector.shape_cast %50 : vector<1x256xi1> to vector<1x256xi1>
    %52 = vector.broadcast %51 : vector<1x256xi1> to vector<4x256xi1>
    %53 = vector.broadcast %cst_19 : f32 to vector<4x256xf32>
    %54 = arith.select %52, %49, %53 : vector<4x256xi1>, vector<4x256xf32>
    %c2 = arith.constant 2 : index
    %c0_20 = arith.constant 0 : index
    %c0_21 = arith.constant 0 : index
    %55 = vector.load %arg2[%c2, %c0_20, %c0_21] : memref<9x4x4xf32, #tpu.memory_space<vmem>>, vector<1x4x4xf32>
    %56 = vector.shape_cast %55 : vector<1x4x4xf32> to vector<4x4xf32>
    %cst_22 = arith.constant dense<0.000000e+00> : vector<4x256xf32>
    %57 = tpu.matmul %56, %54, %cst_22 {dimension_numbers = #tpu.dot_dimension_numbers<[1], [0], [0], [1], [0, 0, 1, 1], [], []>} : vector<4x4xf32>, vector<4x256xf32>, vector<4x256xf32> -> vector<4x256xf32>
    %58 = arith.addf %48, %57 : vector<4x256xf32>
    %c1_i32_23 = arith.constant 1 : i32
    %59 = tpu.dynamic_rotate %1 by %c1_i32_23 dim 1 : vector<4x256xf32>, i32 -> vector<4x256xf32>
    %cst_24 = arith.constant 0.000000e+00 : f32
    %60 = vector.shape_cast %24 : vector<1x256xi1> to vector<1x256xi1>
    %61 = vector.broadcast %60 : vector<1x256xi1> to vector<4x256xi1>
    %62 = vector.broadcast %cst_24 : f32 to vector<4x256xf32>
    %63 = arith.select %61, %59, %62 : vector<4x256xi1>, vector<4x256xf32>
    %c3 = arith.constant 3 : index
    %c0_25 = arith.constant 0 : index
    %c0_26 = arith.constant 0 : index
    %64 = vector.load %arg2[%c3, %c0_25, %c0_26] : memref<9x4x4xf32, #tpu.memory_space<vmem>>, vector<1x4x4xf32>
    %65 = vector.shape_cast %64 : vector<1x4x4xf32> to vector<4x4xf32>
    %cst_27 = arith.constant dense<0.000000e+00> : vector<4x256xf32>
    %66 = tpu.matmul %65, %63, %cst_27 {dimension_numbers = #tpu.dot_dimension_numbers<[1], [0], [0], [1], [0, 0, 1, 1], [], []>} : vector<4x4xf32>, vector<4x256xf32>, vector<4x256xf32> -> vector<4x256xf32>
    %67 = arith.addf %58, %66 : vector<4x256xf32>
    %c4 = arith.constant 4 : index
    %c0_28 = arith.constant 0 : index
    %c0_29 = arith.constant 0 : index
    %68 = vector.load %arg2[%c4, %c0_28, %c0_29] : memref<9x4x4xf32, #tpu.memory_space<vmem>>, vector<1x4x4xf32>
    %69 = vector.shape_cast %68 : vector<1x4x4xf32> to vector<4x4xf32>
    %cst_30 = arith.constant dense<0.000000e+00> : vector<4x256xf32>
    %70 = tpu.matmul %69, %1, %cst_30 {dimension_numbers = #tpu.dot_dimension_numbers<[1], [0], [0], [1], [0, 0, 1, 1], [], []>} : vector<4x4xf32>, vector<4x256xf32>, vector<4x256xf32> -> vector<4x256xf32>
    %71 = arith.addf %67, %70 : vector<4x256xf32>
    %c255_i32 = arith.constant 255 : i32
    %72 = tpu.dynamic_rotate %1 by %c255_i32 dim 1 : vector<4x256xf32>, i32 -> vector<4x256xf32>
    %cst_31 = arith.constant 0.000000e+00 : f32
    %73 = vector.shape_cast %26 : vector<1x256xi1> to vector<1x256xi1>
    %74 = vector.broadcast %73 : vector<1x256xi1> to vector<4x256xi1>
    %75 = vector.broadcast %cst_31 : f32 to vector<4x256xf32>
    %76 = arith.select %74, %72, %75 : vector<4x256xi1>, vector<4x256xf32>
    %c5 = arith.constant 5 : index
    %c0_32 = arith.constant 0 : index
    %c0_33 = arith.constant 0 : index
    %77 = vector.load %arg2[%c5, %c0_32, %c0_33] : memref<9x4x4xf32, #tpu.memory_space<vmem>>, vector<1x4x4xf32>
    %78 = vector.shape_cast %77 : vector<1x4x4xf32> to vector<4x4xf32>
    %cst_34 = arith.constant dense<0.000000e+00> : vector<4x256xf32>
    %79 = tpu.matmul %78, %76, %cst_34 {dimension_numbers = #tpu.dot_dimension_numbers<[1], [0], [0], [1], [0, 0, 1, 1], [], []>} : vector<4x4xf32>, vector<4x256xf32>, vector<4x256xf32> -> vector<4x256xf32>
    %80 = arith.addf %71, %79 : vector<4x256xf32>
    %c241_i32 = arith.constant 241 : i32
    %81 = tpu.dynamic_rotate %1 by %c241_i32 dim 1 : vector<4x256xf32>, i32 -> vector<4x256xf32>
    %82 = arith.andi %22, %24 : vector<1x256xi1>
    %cst_35 = arith.constant 0.000000e+00 : f32
    %83 = vector.shape_cast %82 : vector<1x256xi1> to vector<1x256xi1>
    %84 = vector.broadcast %83 : vector<1x256xi1> to vector<4x256xi1>
    %85 = vector.broadcast %cst_35 : f32 to vector<4x256xf32>
    %86 = arith.select %84, %81, %85 : vector<4x256xi1>, vector<4x256xf32>
    %c6 = arith.constant 6 : index
    %c0_36 = arith.constant 0 : index
    %c0_37 = arith.constant 0 : index
    %87 = vector.load %arg2[%c6, %c0_36, %c0_37] : memref<9x4x4xf32, #tpu.memory_space<vmem>>, vector<1x4x4xf32>
    %88 = vector.shape_cast %87 : vector<1x4x4xf32> to vector<4x4xf32>
    %cst_38 = arith.constant dense<0.000000e+00> : vector<4x256xf32>
    %89 = tpu.matmul %88, %86, %cst_38 {dimension_numbers = #tpu.dot_dimension_numbers<[1], [0], [0], [1], [0, 0, 1, 1], [], []>} : vector<4x4xf32>, vector<4x256xf32>, vector<4x256xf32> -> vector<4x256xf32>
    %90 = arith.addf %80, %89 : vector<4x256xf32>
    %c240_i32_39 = arith.constant 240 : i32
    %91 = tpu.dynamic_rotate %1 by %c240_i32_39 dim 1 : vector<4x256xf32>, i32 -> vector<4x256xf32>
    %cst_40 = arith.constant 0.000000e+00 : f32
    %92 = vector.shape_cast %22 : vector<1x256xi1> to vector<1x256xi1>
    %93 = vector.broadcast %92 : vector<1x256xi1> to vector<4x256xi1>
    %94 = vector.broadcast %cst_40 : f32 to vector<4x256xf32>
    %95 = arith.select %93, %91, %94 : vector<4x256xi1>, vector<4x256xf32>
    %c7 = arith.constant 7 : index
    %c0_41 = arith.constant 0 : index
    %c0_42 = arith.constant 0 : index
    %96 = vector.load %arg2[%c7, %c0_41, %c0_42] : memref<9x4x4xf32, #tpu.memory_space<vmem>>, vector<1x4x4xf32>
    %97 = vector.shape_cast %96 : vector<1x4x4xf32> to vector<4x4xf32>
    %cst_43 = arith.constant dense<0.000000e+00> : vector<4x256xf32>
    %98 = tpu.matmul %97, %95, %cst_43 {dimension_numbers = #tpu.dot_dimension_numbers<[1], [0], [0], [1], [0, 0, 1, 1], [], []>} : vector<4x4xf32>, vector<4x256xf32>, vector<4x256xf32> -> vector<4x256xf32>
    %99 = arith.addf %90, %98 : vector<4x256xf32>
    %c239_i32 = arith.constant 239 : i32
    %100 = tpu.dynamic_rotate %1 by %c239_i32 dim 1 : vector<4x256xf32>, i32 -> vector<4x256xf32>
    %101 = arith.andi %22, %26 : vector<1x256xi1>
    %cst_44 = arith.constant 0.000000e+00 : f32
    %102 = vector.shape_cast %101 : vector<1x256xi1> to vector<1x256xi1>
    %103 = vector.broadcast %102 : vector<1x256xi1> to vector<4x256xi1>
    %104 = vector.broadcast %cst_44 : f32 to vector<4x256xf32>
    %105 = arith.select %103, %100, %104 : vector<4x256xi1>, vector<4x256xf32>
    %c8 = arith.constant 8 : index
    %c0_45 = arith.constant 0 : index
    %c0_46 = arith.constant 0 : index
    %106 = vector.load %arg2[%c8, %c0_45, %c0_46] : memref<9x4x4xf32, #tpu.memory_space<vmem>>, vector<1x4x4xf32>
    %107 = vector.shape_cast %106 : vector<1x4x4xf32> to vector<4x4xf32>
    %cst_47 = arith.constant dense<0.000000e+00> : vector<4x256xf32>
    %108 = tpu.matmul %107, %105, %cst_47 {dimension_numbers = #tpu.dot_dimension_numbers<[1], [0], [0], [1], [0, 0, 1, 1], [], []>} : vector<4x4xf32>, vector<4x256xf32>, vector<4x256xf32> -> vector<4x256xf32>
    %109 = arith.addf %99, %108 : vector<4x256xf32>
    %110 = arith.negf %109 : vector<4x256xf32>
    %111 = math.exp %110 : vector<4x256xf32>
    %cst_48 = arith.constant 1.000000e+00 : f32
    %112 = vector.broadcast %cst_48 : f32 to vector<4x256xf32>
    %113 = arith.addf %112, %111 : vector<4x256xf32>
    %114 = arith.divf %112, %113 : vector<4x256xf32>
    %115 = arith.mulf %109, %114 : vector<4x256xf32>
    %c0_49 = arith.constant 0 : index
    %c0_50 = arith.constant 0 : index
    %c0_51 = arith.constant 0 : index
    %116 = vector.load %arg4[%c0_49, %c0_50, %c0_51] : memref<1x4x256xf32, #tpu.memory_space<vmem>>, vector<1x4x256xf32>
    %117 = vector.shape_cast %116 : vector<1x4x256xf32> to vector<4x256xf32>
    %118 = vector.shape_cast %115 : vector<4x256xf32> to vector<1x4x256xf32>
    tpu.vector_store %arg4[%c0_49, %c0_50, %c0_51], %118 {strides = array<i32>} : memref<1x4x256xf32, #tpu.memory_space<vmem>>, vector<1x4x256xf32>,
    return
  }
  func.func @transform_0(%arg0: i32) -> (i32, i32, i32) {
    %c0_i32 = arith.constant 0 : i32
    %c0_i32_0 = arith.constant 0 : i32
    %c0_i32_1 = arith.constant 0 : i32
    return %arg0, %c0_i32, %c0_i32_0 : i32, i32, i32
  }
  func.func @transform_1(%arg0: i32) -> (i32, i32, i32) {
    %c0_i32 = arith.constant 0 : i32
    %c0_i32_0 = arith.constant 0 : i32
    %c0_i32_1 = arith.constant 0 : i32
    %c0_i32_2 = arith.constant 0 : i32
    return %c0_i32, %c0_i32_0, %c0_i32_1 : i32, i32, i32
  }
  func.func @transform_2(%arg0: i32) -> (i32, i32) {
    %c0_i32 = arith.constant 0 : i32
    %c0_i32_0 = arith.constant 0 : i32
    %c0_i32_1 = arith.constant 0 : i32
    return %c0_i32, %c0_i32_0 : i32, i32
  }
  func.func @transform_3(%arg0: i32) -> (i32, i32, i32) {
    %c0_i32 = arith.constant 0 : i32
    %c0_i32_0 = arith.constant 0 : i32
    %c0_i32_1 = arith.constant 0 : i32
    return %arg0, %c0_i32, %c0_i32_0 : i32, i32, i32
  }
}

</mosaic_0001>

<llo_original>
// kernel: tpu_custom_call.1
$region0: #{tpu_custom_call.1}
  #allocation0 [shape = 'u32[]', space=smem, size = 0x4, offset = 0x4, fixed_abs, tag = 'smem constant byte address 0x4 - core index']
  #allocation1 [shape = 'u32[144,128]{1,0:T(1,128)}', space=vmem, size = 0x12000, scoped, tag = 'internal scratch']
  %s0 = inlined_call_operand.vmem [shape: f32[2,4,256], index: 0, kind: input, shape index: {}]
  %s1 = inlined_call_operand.vmem [shape: f32[9,4,4], index: 1, kind: input, shape index: {}]
  %s2 = inlined_call_operand.vmem [shape: f32[4,1], index: 2, kind: input, shape index: {}]
  %s3 = inlined_call_operand.hbm [shape: f32[2,4,256], index: 3, kind: output, shape index: {}]
  %s4 = sld [smem:[#allocation0]]
  $region45: #{tpu_custom_call.1} parent=0
    _
  %s6 = ssub.s32 1, %s4
  %s7 = scalar_select 0, %s6, %s4
  $region1: #{tpu_custom_call.1} parent=0
    #allocation2 [shape = 'u8[8192]{0}', space=vmem, size = 0x2000, scoped, tag = 'output window, operand 0']
    #allocation3 [shape = 's32[2]{0}', space=sflag, size = 0x8, scoped, tag = 'scoped memory for tpu_custom_call.1']
    %8 = vsyncpa [#allocation3], 0
    %s9 = scalar_lea.sflag [#allocation3], 1
    %10 = vsyncpa %s9, 0
    loop: start=0, step=1, limit=4
    $region2: #{tpu_custom_call.1} parent=1 // loop_pre_header
      _
    $region3: #{tpu_custom_call.1} parent=1 // loop_header
      %s12 = sphi 0, %s16
      %p13 = scmp.ge.s32.totalorder %s12, 4
      %s22 = sphi 0, %s24
      %s25 = sphi 0, %s22
      %s26 = sphi 0, %s25
      %s42 = sphi 0, %s26
      %s46 = sphi 0, %s46
      %s48 = sphi 0, %s46
      %s49 = sphi 0, %s48
      %s63 = sphi 0, %s49
      %s67 = sphi 0, %s67
      %s69 = sphi 0, %s67
      %s70 = sphi 0, %s69
      %s84 = sphi 0, %s70
      %s90 = sphi 0, %s92
      %s93 = sphi 0, %s90
      %s94 = sphi 0, %s93
      %s110 = sphi 0, %s94
    $region4: #{tpu_custom_call.1} parent=1 // loop_header_branch
      %15 = sbr.rel (%p13) target = $region8
    $region5: #{tpu_custom_call.1} parent=1 // loop_body
      %s17 = ssub.s32 %s12, 1
      %s18 = ssub.s32 %s12, 2
      %s19 = sadd.s32 %s12, 1
      %s20 = ssub.s32 %s12, %s19
      %p21 = scmp.eq.s32.totalorder %s20, 0
      %s23 = sadd.s32 %s22, 1
      %s24 = scalar_select %p21, %s22, %s23
      %p27 = pneg %p21
      %p28 = scmp.eq.s32.totalorder %s12, 1
      %p29 = por %p27, %p28
      %p30 = scmp.ne.s32.totalorder %s22, %s25
      %p31 = scmp.eq.s32.totalorder %s12, 0
      %p32 = por %p30, %p31
      %p33 = scmp.ne.s32.totalorder %s22, %s25
      %p34 = scmp.eq.s32.totalorder %s17, 1
      %p35 = por %p33, %p34
      %p36 = scmp.ne.s32.totalorder %s25, %s26
      %p37 = scmp.eq.s32.totalorder %s17, 0
      %p38 = por %p36, %p37
      %p39 = scmp.ne.s32.totalorder %s25, %s26
      %p40 = scmp.eq.s32.totalorder %s18, 1
      %p41 = por %p39, %p40
      %p43 = scmp.ne.s32.totalorder %s26, %s42
      %p44 = scmp.eq.s32.totalorder %s18, 0
      %p45 = por %p43, %p44
      %s47 = sadd.s32 %s46, 1
      %p50 = scmp.eq.s32.totalorder %s12, 1
      %p51 = scmp.ne.s32.totalorder %s46, %s48
      %p52 = scmp.eq.s32.totalorder %s12, 0
      %p53 = por %p51, %p52
      %p54 = scmp.ne.s32.totalorder %s46, %s48
      %p55 = scmp.eq.s32.totalorder %s17, 1
      %p56 = por %p54, %p55
      %p57 = scmp.ne.s32.totalorder %s48, %s49
      %p58 = scmp.eq.s32.totalorder %s17, 0
      %p59 = por %p57, %p58
      %p60 = scmp.ne.s32.totalorder %s48, %s49
      %p61 = scmp.eq.s32.totalorder %s18, 1
      %p62 = por %p60, %p61
      %p64 = scmp.ne.s32.totalorder %s49, %s63
      %p65 = scmp.eq.s32.totalorder %s18, 0
      %p66 = por %p64, %p65
      %s68 = sadd.s32 %s67, 1
      %p71 = scmp.eq.s32.totalorder %s12, 1
      %p72 = scmp.ne.s32.totalorder %s67, %s69
      %p73 = scmp.eq.s32.totalorder %s12, 0
      %p74 = por %p72, %p73
      %p75 = scmp.ne.s32.totalorder %s67, %s69
      %p76 = scmp.eq.s32.totalorder %s17, 1
      %p77 = por %p75, %p76
      %p78 = scmp.ne.s32.totalorder %s69, %s70
      %p79 = scmp.eq.s32.totalorder %s17, 0
      %p80 = por %p78, %p79
      %p81 = scmp.ne.s32.totalorder %s69, %s70
      %p82 = scmp.eq.s32.totalorder %s18, 1
      %p83 = por %p81, %p82
      %p85 = scmp.ne.s32.totalorder %s70, %s84
      %p86 = scmp.eq.s32.totalorder %s18, 0
      %p87 = por %p85, %p86
      %s88 = ssub.s32 %s12, %s19
      %p89 = scmp.eq.s32.totalorder %s88, 0
      %s91 = sadd.s32 %s90, 1
      %s92 = scalar_select %p89, %s90, %s91
      %p95 = pneg %p89
      %p96 = scmp.eq.s32.totalorder %s12, 1
      %p97 = por %p95, %p96
      %p98 = scmp.ne.s32.totalorder %s90, %s93
      %p99 = scmp.eq.s32.totalorder %s12, 0
      %p100 = por %p98, %p99
      %p101 = scmp.ne.s32.totalorder %s90, %s93
      %p102 = scmp.eq.s32.totalorder %s17, 1
      %p103 = por %p101, %p102
      %p104 = scmp.ne.s32.totalorder %s93, %s94
      %p105 = scmp.eq.s32.totalorder %s17, 0
      %p106 = por %p104, %p105
      %p107 = scmp.ne.s32.totalorder %s93, %s94
      %p108 = scmp.eq.s32.totalorder %s18, 1
      %p109 = por %p107, %p108
      %p111 = scmp.ne.s32.totalorder %s94, %s110
      %p112 = scmp.eq.s32.totalorder %s18, 0
      %p113 = por %p111, %p112
      %p114 = scmp.le.s32.totalorder 1, %s12
      %p115 = scmp.lt.s32.totalorder %s12, 3
      %p116 = pnand %p114, %p115
      %p117 = pneg %p116
      // Predicated region
      $region9: #{tpu_custom_call.1} parent=5 // pred_check
        _
      $region10: #{tpu_custom_call.1} parent=5 // pred_check_branch
        %119 = sbr.rel (%p116) target = $region12
      $region11: #{tpu_custom_call.1} parent=5 // pred_region
        %s120 = ssub.s32 %s12, 1
        // Predicated region
        $region13: #{tpu_custom_call.1} parent=11 // pred_check
          %p121 = pneg %p59
        $region14: #{tpu_custom_call.1} parent=11 // pred_check_branch
          %123 = sbr.rel (%p121) target = $region16
        $region15: #{tpu_custom_call.1} parent=11 // pred_region
          _
        $region16: #{tpu_custom_call.1} parent=11 // pred_fallthru
          _
        // Predicated region
        $region17: #{tpu_custom_call.1} parent=11 // pred_check
          %p124 = pneg %p80
        $region18: #{tpu_custom_call.1} parent=11 // pred_check_branch
          %126 = sbr.rel (%p124) target = $region20
        $region19: #{tpu_custom_call.1} parent=11 // pred_region
          _
        $region20: #{tpu_custom_call.1} parent=11 // pred_fallthru
          _
      $region12: #{tpu_custom_call.1} parent=5 // pred_fallthru
        _
      %p127 = scmp.lt.s32.totalorder %s12, 2
      // Predicated region
      $region21: #{tpu_custom_call.1} parent=5 // pred_check
        %p128 = pneg %p127
      $region22: #{tpu_custom_call.1} parent=5 // pred_check_branch
        %130 = sbr.rel (%p128) target = $region24
      $region23: #{tpu_custom_call.1} parent=5 // pred_region
        // Predicated region
        $region25: #{tpu_custom_call.1} parent=23 // pred_check
          %p131 = pneg %p32
        $region26: #{tpu_custom_call.1} parent=23 // pred_check_branch
          %133 = sbr.rel (%p131) target = $region28
        $region27: #{tpu_custom_call.1} parent=23 // pred_region
          %p134 = scmp.lt.s32.totalorder %s12, 1
          %s135 = scalar_select %p134, %s12, 1
          %s136 = smul.addr %s135, 2
          %s137 = smul.addr %s136, 4
          %s138 = scalar_lea.vmem %s0, %s137
        $region28: #{tpu_custom_call.1} parent=23 // pred_fallthru
          _
      $region24: #{tpu_custom_call.1} parent=5 // pred_fallthru
        _
      %p139 = scmp.le.s32.totalorder 1, %s12
      %p140 = scmp.lt.s32.totalorder %s12, 3
      %p141 = pnand %p139, %p140
      %p142 = pneg %p141
      // Predicated region
      $region29: #{tpu_custom_call.1} parent=5 // pred_check
        _
      $region30: #{tpu_custom_call.1} parent=5 // pred_check_branch
        %144 = sbr.rel (%p141) target = $region32
      $region31: #{tpu_custom_call.1} parent=5 // pred_region
        %s145 = ssub.s32 %s12, 1
        %p146 = scmp.lt.s32.totalorder %s17, 1
        %s147 = scalar_select %p146, %s17, 1
        %s148 = smul.addr %s147, 2
        %s149 = smul.addr %s148, 4
        %s150 = scalar_lea.vmem %s0, %s149
        %p151 = pneg %p38
        %p152 = pneg %p35
        %p153 = pneg %p59
        %p154 = pneg %p56
        %p155 = pneg %p80
        %p156 = pneg %p77
        %p157 = pneg %p106
        %p158 = pneg %p103
        %s159 = sand.u32 %s93, 1
        %s160 = scalar_lea.sflag [#allocation3], %s159
        %s161 = sand.u32 %s93, 1
        %s162 = smul.addr %s161, 8
        %s163 = scalar_lea.vmem [#allocation2], %s162
        %p164 = scmp.lt.s32.totalorder %s17, 1
        %s165 = scalar_select %p164, %s17, 1
        %s166 = smul.addr %s165, 2
        %s167 = smul.addr %s166, 4
        %s168 = scalar_lea.vmem %s0, %s167
        %v169 = vld [vmem:[%s168] sm:$0xff]
        %v170 = vlaneseq
        %v171 = vand.u32 %v170, 127
        %v172 = vadd.s32 %v171, 128
        %vm173 = vcmp.lt.s32.totalorder %v171, 0
        %v174 = vsub.s32 0, %v171
        %v175 = vsel %vm173, %v174, %v171
        %v176 = vshrl.u32 %v175, 4
        %v177 = vand.u32 %v175, 15
        %v178 = vsub.s32 0, %v177
        %v179 = vsel %vm173, %v178, %v177
        %vm180 = vcmp.lt.s32.totalorder %v172, 0
        %v181 = vsub.s32 0, %v172
        %v182 = vsel %vm180, %v181, %v172
        %v183 = vshrl.u32 %v182, 4
        %v184 = vand.u32 %v182, 15
        %v185 = vsub.s32 0, %v184
        %v186 = vsel %vm180, %v185, %v184
        %vm187 = vcmp.ne.s32.totalorder %v179, 0
        %vm188 = vcmp.ne.s32.totalorder %v186, 0
        %vm189 = vcmp.lt.s32.totalorder %v179, 0
        %vm190 = vcmp.lt.s32.totalorder %v186, 0
        %vm191 = vmand %vm189, %vm187
        %vm192 = vmand %vm190, %vm188
        %v193 = vadd.s32 %v179, 16
        %v194 = vadd.s32 %v186, 16
        %v195 = vsel %vm191, %v193, %v179
        %v196 = vsel %vm192, %v194, %v186
        %vm197 = vcmp.ge.s32.totalorder %v171, 16
        %vm198 = vcmp.ge.s32.totalorder %v172, 16
        %vm199 = vcmp.lt.s32.totalorder %v171, 240
        %vm200 = vcmp.lt.s32.totalorder %v172, 240
        %vm201 = vcmp.ge.s32.totalorder %v195, 1
        %vm202 = vcmp.ge.s32.totalorder %v196, 1
        %vm203 = vcmp.lt.s32.totalorder %v195, 15
        %vm204 = vcmp.lt.s32.totalorder %v196, 15
        %v205 = vld [vmem:[%s2] sm:$0xf]
        %207 = vset.pattern.permute.xlu0 0
        %208 = vperm.xlu0 %207, %v205
        %v209 = vpop.permute.xlu0 %208
        %v212 = vcombine.high %v169, %v169
        %214 = vrot.lane.b32.xlu0 %v169, 17
        %v215 = vpop.permute.xlu0 %214
        %216 = vrot.lane.b32.xlu0 %v212, 17
        %v217 = vpop.permute.xlu0 %216
        %vm218 = vcmp.lt.s32.totalorder %v171, 17
        %v219 = vsel %vm218, %v215, %v217
        %v220 = vsel %vm218, %v217, %v215
        %vm221 = vmand %vm197, %vm201
        %vm222 = vmand %vm198, %vm202
        %v223 = vsel %vm221, 1, 0
        %v224 = vsel %vm222, 1, 0
        %vm225 = vcmp.eq.s32.totalorder %v223, 1
        %vm226 = vcmp.eq.s32.totalorder %v224, 1
        %v227 = vsel %vm225, %v220, 0.0
        %v228 = vsel %vm226, %v219, 0.0
        %v229 = vld [vmem:[%s1] sm:$0xf]
        %vm230 = vcmask 31744
        %v232 = vsel %vm230, %v229, 0
        %vm234 = vcmask 1043456
        %v236 = vsel %vm234, %v227, 0
        %v239 = vsel %vm234, %v228, 0
        %241 = vmatprep.subr.mxu0 0.0
        %242 = vmatpush1.msra.mxu0 0.0
        %243 = vmatprep.subr.mxu0 0.0
        %244 = vmatpush1.msra.mxu0 0.0
        %245 = vmatprep.subr.mxu0 0.0
        %246 = vmatpush1.msra.mxu0 0.0
        %247 = vmatprep.subr.mxu0 0.0
        %248 = vmatpush1.msra.mxu0 0.0
        %249 = vmatprep.subr.mxu0 0.0
        %250 = vmatpush1.msra.mxu0 0.0
        %251 = vmatprep.subr.mxu0 0.0
        %252 = vmatpush1.msra.mxu0 0.0
        %253 = vmatprep.subr.mxu0 0.0
        %254 = vmatpush1.msra.mxu0 0.0
        %255 = vmatprep.subr.mxu0 0.0
        %256 = vmatpush1.msra.mxu0 0.0
        %257 = vmatprep.subr.mxu0 0.0
        %258 = vmatpush1.msra.mxu0 0.0
        %259 = vmatprep.subr.mxu0 0.0
        %260 = vmatpush1.msra.mxu0 0.0
        %261 = vmatprep.subr.mxu0 0.0
        %262 = vmatpush1.msra.mxu0 0.0
        %263 = vmatprep.subr.mxu0 0.0
        %264 = vmatpush1.msra.mxu0 0.0
        %265 = vmatprep.subr.mxu0 0.0
        %266 = vmatpush1.msra.mxu0 0.0
        %267 = vmatprep.subr.mxu0 0.0
        %268 = vmatpush1.msra.mxu0 0.0
        %269 = vmatprep.subr.mxu0 0.0
        %270 = vmatpush1.msra.mxu0 0.0
        %271 = vmatprep.subr.mxu0 %v239
        %272 = vmatpush1.msra.mxu0 %v236
        %273 = vmatprep.subr.mxu0 0.0
        %274 = vmatpush2.msra.mxu0 0.0
        %275 = vmatprep.subr.mxu0 0.0
        %276 = vmatpush2.msra.mxu0 0.0
        %277 = vmatprep.subr.mxu0 0.0
        %278 = vmatpush2.msra.mxu0 0.0
        %279 = vmatprep.subr.mxu0 0.0
        %280 = vmatpush2.msra.mxu0 0.0
        %281 = vmatprep.subr.mxu0 0.0
        %282 = vmatpush2.msra.mxu0 0.0
        %283 = vmatprep.subr.mxu0 0.0
        %284 = vmatpush2.msra.mxu0 0.0
        %285 = vmatprep.subr.mxu0 0.0
        %286 = vmatpush2.msra.mxu0 0.0
        %287 = vmatprep.subr.mxu0 0.0
        %288 = vmatpush2.msra.mxu0 0.0
        %289 = vmatprep.subr.mxu0 0.0
        %290 = vmatpush2.msra.mxu0 0.0
        %291 = vmatprep.subr.mxu0 0.0
        %292 = vmatpush2.msra.mxu0 0.0
        %293 = vmatprep.subr.mxu0 0.0
        %294 = vmatpush2.msra.mxu0 0.0
        %295 = vmatprep.subr.mxu0 0.0
        %296 = vmatpush2.msra.mxu0 0.0
        %297 = vmatprep.subr.mxu0 0.0
        %298 = vmatpush2.msra.mxu0 0.0
        %299 = vmatprep.subr.mxu0 0.0
        %300 = vmatpush2.msra.mxu0 0.0
        %301 = vmatprep.subr.mxu0 0.0
        %302 = vmatpush2.msra.mxu0 0.0
        %303 = vmatprep.subr.mxu0 0.0
        %304 = vmatpush2.msra.mxu0 0.0
        %305 = vmatprep.mubr.f32.mxu0 0.0
        %306 = vmatmul.mubr.f32.gmra.mxu0 %v232
        %v307 = vpop.f32.mrf.mxu0
        %v308 = vadd.f32 0.0, %v307
        %v309 = vpop.f32.mrf.mxu0
        %v310 = vadd.f32 0.0, %v309
        %311 = vdwg.mxu0
        %v312 = vadd.f32 %v209, %v308
        %v313 = vadd.f32 %v209, %v310
        %314 = vrot.lane.b32.xlu0 %v169, 16
        %v315 = vpop.permute.xlu0 %314
        %316 = vrot.lane.b32.xlu0 %v212, 16
        %v317 = vpop.permute.xlu0 %316
        %vm318 = vcmp.lt.s32.totalorder %v171, 16
        %v319 = vsel %vm318, %v315, %v317
        %v320 = vsel %vm318, %v317, %v315
        %v321 = vsel %vm197, 1, 0
        %v322 = vsel %vm198, 1, 0
        %vm323 = vcmp.eq.s32.totalorder %v321, 1
        %vm324 = vcmp.eq.s32.totalorder %v322, 1
        %v325 = vsel %vm323, %v320, 0.0
        %v326 = vsel %vm324, %v319, 0.0
        %s327 = scalar_lea.vmem %s1, 4
        %v328 = vld [vmem:[%s327] sm:$0xf]
        %v330 = vsel %vm230, %v328, 0
        %v333 = vsel %vm234, %v325, 0
        %v336 = vsel %vm234, %v326, 0
        %338 = vmatprep.subr.mxu0 0.0
        %339 = vmatpush1.msra.mxu0 0.0
        %340 = vmatprep.subr.mxu0 0.0
        %341 = vmatpush1.msra.mxu0 0.0
        %342 = vmatprep.subr.mxu0 0.0
        %343 = vmatpush1.msra.mxu0 0.0
        %344 = vmatprep.subr.mxu0 0.0
        %345 = vmatpush1.msra.mxu0 0.0
        %346 = vmatprep.subr.mxu0 0.0
        %347 = vmatpush1.msra.mxu0 0.0
        %348 = vmatprep.subr.mxu0 0.0
        %349 = vmatpush1.msra.mxu0 0.0
        %350 = vmatprep.subr.mxu0 0.0
        %351 = vmatpush1.msra.mxu0 0.0
        %352 = vmatprep.subr.mxu0 0.0
        %353 = vmatpush1.msra.mxu0 0.0
        %354 = vmatprep.subr.mxu0 0.0
        %355 = vmatpush1.msra.mxu0 0.0
        %356 = vmatprep.subr.mxu0 0.0
        %357 = vmatpush1.msra.mxu0 0.0
        %358 = vmatprep.subr.mxu0 0.0
        %359 = vmatpush1.msra.mxu0 0.0
        %360 = vmatprep.subr.mxu0 0.0
        %361 = vmatpush1.msra.mxu0 0.0
        %362 = vmatprep.subr.mxu0 0.0
        %363 = vmatpush1.msra.mxu0 0.0
        %364 = vmatprep.subr.mxu0 0.0
        %365 = vmatpush1.msra.mxu0 0.0
        %366 = vmatprep.subr.mxu0 0.0
        %367 = vmatpush1.msra.mxu0 0.0
        %368 = vmatprep.subr.mxu0 %v336
        %369 = vmatpush1.msra.mxu0 %v333
        %370 = vmatprep.subr.mxu0 0.0
        %371 = vmatpush2.msra.mxu0 0.0
        %372 = vmatprep.subr.mxu0 0.0
        %373 = vmatpush2.msra.mxu0 0.0
        %374 = vmatprep.subr.mxu0 0.0
        %375 = vmatpush2.msra.mxu0 0.0
        %376 = vmatprep.subr.mxu0 0.0
        %377 = vmatpush2.msra.mxu0 0.0
        %378 = vmatprep.subr.mxu0 0.0
        %379 = vmatpush2.msra.mxu0 0.0
        %380 = vmatprep.subr.mxu0 0.0
        %381 = vmatpush2.msra.mxu0 0.0
        %382 = vmatprep.subr.mxu0 0.0
        %383 = vmatpush2.msra.mxu0 0.0
        %384 = vmatprep.subr.mxu0 0.0
        %385 = vmatpush2.msra.mxu0 0.0
        %386 = vmatprep.subr.mxu0 0.0
        %387 = vmatpush2.msra.mxu0 0.0
        %388 = vmatprep.subr.mxu0 0.0
        %389 = vmatpush2.msra.mxu0 0.0
        %390 = vmatprep.subr.mxu0 0.0
        %391 = vmatpush2.msra.mxu0 0.0
        %392 = vmatprep.subr.mxu0 0.0
        %393 = vmatpush2.msra.mxu0 0.0
        %394 = vmatprep.subr.mxu0 0.0
        %395 = vmatpush2.msra.mxu0 0.0
        %396 = vmatprep.subr.mxu0 0.0
        %397 = vmatpush2.msra.mxu0 0.0
        %398 = vmatprep.subr.mxu0 0.0
        %399 = vmatpush2.msra.mxu0 0.0
        %400 = vmatprep.subr.mxu0 0.0
        %401 = vmatpush2.msra.mxu0 0.0
        %402 = vmatprep.mubr.f32.mxu0 0.0
        %403 = vmatmul.mubr.f32.gmra.mxu0 %v330
        %v404 = vpop.f32.mrf.mxu0
        %v405 = vadd.f32 0.0, %v404
        %v406 = vpop.f32.mrf.mxu0
        %v407 = vadd.f32 0.0, %v406
        %408 = vdwg.mxu0
        %v409 = vadd.f32 %v312, %v405
        %v410 = vadd.f32 %v313, %v407
        %411 = vrot.lane.b32.xlu0 %v169, 15
        %v412 = vpop.permute.xlu0 %411
        %413 = vrot.lane.b32.xlu0 %v212, 15
        %v414 = vpop.permute.xlu0 %413
        %vm415 = vcmp.lt.s32.totalorder %v171, 15
        %v416 = vsel %vm415, %v412, %v414
        %v417 = vsel %vm415, %v414, %v412
        %vm418 = vmand %vm197, %vm203
        %vm419 = vmand %vm198, %vm204
        %v420 = vsel %vm418, 1, 0
        %v421 = vsel %vm419, 1, 0
        %vm422 = vcmp.eq.s32.totalorder %v420, 1
        %vm423 = vcmp.eq.s32.totalorder %v421, 1
        %v424 = vsel %vm422, %v417, 0.0
        %v425 = vsel %vm423, %v416, 0.0
        %s426 = scalar_lea.vmem %s1, 8
        %v427 = vld [vmem:[%s426] sm:$0xf]
        %v429 = vsel %vm230, %v427, 0
        %v432 = vsel %vm234, %v424, 0
        %v435 = vsel %vm234, %v425, 0
        %437 = vmatprep.subr.mxu0 0.0
        %438 = vmatpush1.msra.mxu0 0.0
        %439 = vmatprep.subr.mxu0 0.0
        %440 = vmatpush1.msra.mxu0 0.0
        %441 = vmatprep.subr.mxu0 0.0
        %442 = vmatpush1.msra.mxu0 0.0
        %443 = vmatprep.subr.mxu0 0.0
        %444 = vmatpush1.msra.mxu0 0.0
        %445 = vmatprep.subr.mxu0 0.0
        %446 = vmatpush1.msra.mxu0 0.0
        %447 = vmatprep.subr.mxu0 0.0
        %448 = vmatpush1.msra.mxu0 0.0
        %449 = vmatprep.subr.mxu0 0.0
        %450 = vmatpush1.msra.mxu0 0.0
        %451 = vmatprep.subr.mxu0 0.0
        %452 = vmatpush1.msra.mxu0 0.0
        %453 = vmatprep.subr.mxu0 0.0
        %454 = vmatpush1.msra.mxu0 0.0
        %455 = vmatprep.subr.mxu0 0.0
        %456 = vmatpush1.msra.mxu0 0.0
        %457 = vmatprep.subr.mxu0 0.0
        %458 = vmatpush1.msra.mxu0 0.0
        %459 = vmatprep.subr.mxu0 0.0
        %460 = vmatpush1.msra.mxu0 0.0
        %461 = vmatprep.subr.mxu0 0.0
        %462 = vmatpush1.msra.mxu0 0.0
        %463 = vmatprep.subr.mxu0 0.0
        %464 = vmatpush1.msra.mxu0 0.0
        %465 = vmatprep.subr.mxu0 0.0
        %466 = vmatpush1.msra.mxu0 0.0
        %467 = vmatprep.subr.mxu0 %v435
        %468 = vmatpush1.msra.mxu0 %v432
        %469 = vmatprep.subr.mxu0 0.0
        %470 = vmatpush2.msra.mxu0 0.0
        %471 = vmatprep.subr.mxu0 0.0
        %472 = vmatpush2.msra.mxu0 0.0
        %473 = vmatprep.subr.mxu0 0.0
        %474 = vmatpush2.msra.mxu0 0.0
        %475 = vmatprep.subr.mxu0 0.0
        %476 = vmatpush2.msra.mxu0 0.0
        %477 = vmatprep.subr.mxu0 0.0
        %478 = vmatpush2.msra.mxu0 0.0
        %479 = vmatprep.subr.mxu0 0.0
        %480 = vmatpush2.msra.mxu0 0.0
        %481 = vmatprep.subr.mxu0 0.0
        %482 = vmatpush2.msra.mxu0 0.0
        %483 = vmatprep.subr.mxu0 0.0
        %484 = vmatpush2.msra.mxu0 0.0
        %485 = vmatprep.subr.mxu0 0.0
        %486 = vmatpush2.msra.mxu0 0.0
        %487 = vmatprep.subr.mxu0 0.0
        %488 = vmatpush2.msra.mxu0 0.0
        %489 = vmatprep.subr.mxu0 0.0
        %490 = vmatpush2.msra.mxu0 0.0
        %491 = vmatprep.subr.mxu0 0.0
        %492 = vmatpush2.msra.mxu0 0.0
        %493 = vmatprep.subr.mxu0 0.0
        %494 = vmatpush2.msra.mxu0 0.0
        %495 = vmatprep.subr.mxu0 0.0
        %496 = vmatpush2.msra.mxu0 0.0
        %497 = vmatprep.subr.mxu0 0.0
        %498 = vmatpush2.msra.mxu0 0.0
        %499 = vmatprep.subr.mxu0 0.0
        %500 = vmatpush2.msra.mxu0 0.0
        %501 = vmatprep.mubr.f32.mxu0 0.0
        %502 = vmatmul.mubr.f32.gmra.mxu0 %v429
        %v503 = vpop.f32.mrf.mxu0
        %v504 = vadd.f32 0.0, %v503
        %v505 = vpop.f32.mrf.mxu0
        %v506 = vadd.f32 0.0, %v505
        %507 = vdwg.mxu0
        %v508 = vadd.f32 %v409, %v504
        %v509 = vadd.f32 %v410, %v506
        %510 = vrot.lane.b32.xlu0 %v169, 1
        %v511 = vpop.permute.xlu0 %510
        %512 = vrot.lane.b32.xlu0 %v212, 1
        %v513 = vpop.permute.xlu0 %512
        %vm514 = vcmp.lt.s32.totalorder %v171, 1
        %v515 = vsel %vm514, %v511, %v513
        %v516 = vsel %vm514, %v513, %v511
        %v517 = vsel %vm201, 1, 0
        %v518 = vsel %vm202, 1, 0
        %vm519 = vcmp.eq.s32.totalorder %v517, 1
        %vm520 = vcmp.eq.s32.totalorder %v518, 1
        %v521 = vsel %vm519, %v516, 0.0
        %v522 = vsel %vm520, %v515, 0.0
        %s523 = scalar_lea.vmem %s1, 12
        %v524 = vld [vmem:[%s523] sm:$0xf]
        %v526 = vsel %vm230, %v524, 0
        %v529 = vsel %vm234, %v521, 0
        %v532 = vsel %vm234, %v522, 0
        %534 = vmatprep.subr.mxu0 0.0
        %535 = vmatpush1.msra.mxu0 0.0
        %536 = vmatprep.subr.mxu0 0.0
        %537 = vmatpush1.msra.mxu0 0.0
        %538 = vmatprep.subr.mxu0 0.0
        %539 = vmatpush1.msra.mxu0 0.0
        %540 = vmatprep.subr.mxu0 0.0
        %541 = vmatpush1.msra.mxu0 0.0
        %542 = vmatprep.subr.mxu0 0.0
        %543 = vmatpush1.msra.mxu0 0.0
        %544 = vmatprep.subr.mxu0 0.0
        %545 = vmatpush1.msra.mxu0 0.0
        %546 = vmatprep.subr.mxu0 0.0
        %547 = vmatpush1.msra.mxu0 0.0
        %548 = vmatprep.subr.mxu0 0.0
        %549 = vmatpush1.msra.mxu0 0.0
        %550 = vmatprep.subr.mxu0 0.0
        %551 = vmatpush1.msra.mxu0 0.0
        %552 = vmatprep.subr.mxu0 0.0
        %553 = vmatpush1.msra.mxu0 0.0
        %554 = vmatprep.subr.mxu0 0.0
        %555 = vmatpush1.msra.mxu0 0.0
        %556 = vmatprep.subr.mxu0 0.0
        %557 = vmatpush1.msra.mxu0 0.0
        %558 = vmatprep.subr.mxu0 0.0
        %559 = vmatpush1.msra.mxu0 0.0
        %560 = vmatprep.subr.mxu0 0.0
        %561 = vmatpush1.msra.mxu0 0.0
        %562 = vmatprep.subr.mxu0 0.0
        %563 = vmatpush1.msra.mxu0 0.0
        %564 = vmatprep.subr.mxu0 %v532
        %565 = vmatpush1.msra.mxu0 %v529
        %566 = vmatprep.subr.mxu0 0.0
        %567 = vmatpush2.msra.mxu0 0.0
        %568 = vmatprep.subr.mxu0 0.0
        %569 = vmatpush2.msra.mxu0 0.0
        %570 = vmatprep.subr.mxu0 0.0
        %571 = vmatpush2.msra.mxu0 0.0
        %572 = vmatprep.subr.mxu0 0.0
        %573 = vmatpush2.msra.mxu0 0.0
        %574 = vmatprep.subr.mxu0 0.0
        %575 = vmatpush2.msra.mxu0 0.0
        %576 = vmatprep.subr.mxu0 0.0
        %577 = vmatpush2.msra.mxu0 0.0
        %578 = vmatprep.subr.mxu0 0.0
        %579 = vmatpush2.msra.mxu0 0.0
        %580 = vmatprep.subr.mxu0 0.0
        %581 = vmatpush2.msra.mxu0 0.0
        %582 = vmatprep.subr.mxu0 0.0
        %583 = vmatpush2.msra.mxu0 0.0
        %584 = vmatprep.subr.mxu0 0.0
        %585 = vmatpush2.msra.mxu0 0.0
        %586 = vmatprep.subr.mxu0 0.0
        %587 = vmatpush2.msra.mxu0 0.0
        %588 = vmatprep.subr.mxu0 0.0
        %589 = vmatpush2.msra.mxu0 0.0
        %590 = vmatprep.subr.mxu0 0.0
        %591 = vmatpush2.msra.mxu0 0.0
        %592 = vmatprep.subr.mxu0 0.0
        %593 = vmatpush2.msra.mxu0 0.0
        %594 = vmatprep.subr.mxu0 0.0
        %595 = vmatpush2.msra.mxu0 0.0
        %596 = vmatprep.subr.mxu0 0.0
        %597 = vmatpush2.msra.mxu0 0.0
        %598 = vmatprep.mubr.f32.mxu0 0.0
        %599 = vmatmul.mubr.f32.gmra.mxu0 %v526
        %v600 = vpop.f32.mrf.mxu0
        %v601 = vadd.f32 0.0, %v600
        %v602 = vpop.f32.mrf.mxu0
        %v603 = vadd.f32 0.0, %v602
        %604 = vdwg.mxu0
        %v605 = vadd.f32 %v508, %v601
        %v606 = vadd.f32 %v509, %v603
        %s607 = scalar_lea.vmem %s1, 16
        %v608 = vld [vmem:[%s607] sm:$0xf]
        %v610 = vsel %vm230, %v608, 0
        %v612 = vsel %vm234, %v169, 0
        %v614 = vsel %vm234, %v212, 0
        %616 = vmatprep.subr.mxu0 0.0
        %617 = vmatpush1.msra.mxu0 0.0
        %618 = vmatprep.subr.mxu0 0.0
        %619 = vmatpush1.msra.mxu0 0.0
        %620 = vmatprep.subr.mxu0 0.0
        %621 = vmatpush1.msra.mxu0 0.0
        %622 = vmatprep.subr.mxu0 0.0
        %623 = vmatpush1.msra.mxu0 0.0
        %624 = vmatprep.subr.mxu0 0.0
        %625 = vmatpush1.msra.mxu0 0.0
        %626 = vmatprep.subr.mxu0 0.0
        %627 = vmatpush1.msra.mxu0 0.0
        %628 = vmatprep.subr.mxu0 0.0
        %629 = vmatpush1.msra.mxu0 0.0
        %630 = vmatprep.subr.mxu0 0.0
        %631 = vmatpush1.msra.mxu0 0.0
        %632 = vmatprep.subr.mxu0 0.0
        %633 = vmatpush1.msra.mxu0 0.0
        %634 = vmatprep.subr.mxu0 0.0
        %635 = vmatpush1.msra.mxu0 0.0
        %636 = vmatprep.subr.mxu0 0.0
        %637 = vmatpush1.msra.mxu0 0.0
        %638 = vmatprep.subr.mxu0 0.0
        %639 = vmatpush1.msra.mxu0 0.0
        %640 = vmatprep.subr.mxu0 0.0
        %641 = vmatpush1.msra.mxu0 0.0
        %642 = vmatprep.subr.mxu0 0.0
        %643 = vmatpush1.msra.mxu0 0.0
        %644 = vmatprep.subr.mxu0 0.0
        %645 = vmatpush1.msra.mxu0 0.0
        %646 = vmatprep.subr.mxu0 %v614
        %647 = vmatpush1.msra.mxu0 %v612
        %648 = vmatprep.subr.mxu0 0.0
        %649 = vmatpush2.msra.mxu0 0.0
        %650 = vmatprep.subr.mxu0 0.0
        %651 = vmatpush2.msra.mxu0 0.0
        %652 = vmatprep.subr.mxu0 0.0
        %653 = vmatpush2.msra.mxu0 0.0
        %654 = vmatprep.subr.mxu0 0.0
        %655 = vmatpush2.msra.mxu0 0.0
        %656 = vmatprep.subr.mxu0 0.0
        %657 = vmatpush2.msra.mxu0 0.0
        %658 = vmatprep.subr.mxu0 0.0
        %659 = vmatpush2.msra.mxu0 0.0
        %660 = vmatprep.subr.mxu0 0.0
        %661 = vmatpush2.msra.mxu0 0.0
        %662 = vmatprep.subr.mxu0 0.0
        %663 = vmatpush2.msra.mxu0 0.0
        %664 = vmatprep.subr.mxu0 0.0
        %665 = vmatpush2.msra.mxu0 0.0
        %666 = vmatprep.subr.mxu0 0.0
        %667 = vmatpush2.msra.mxu0 0.0
        %668 = vmatprep.subr.mxu0 0.0
        %669 = vmatpush2.msra.mxu0 0.0
        %670 = vmatprep.subr.mxu0 0.0
        %671 = vmatpush2.msra.mxu0 0.0
        %672 = vmatprep.subr.mxu0 0.0
        %673 = vmatpush2.msra.mxu0 0.0
        %674 = vmatprep.subr.mxu0 0.0
        %675 = vmatpush2.msra.mxu0 0.0
        %676 = vmatprep.subr.mxu0 0.0
        %677 = vmatpush2.msra.mxu0 0.0
        %678 = vmatprep.subr.mxu0 0.0
        %679 = vmatpush2.msra.mxu0 0.0
        %680 = vmatprep.mubr.f32.mxu0 0.0
        %681 = vmatmul.mubr.f32.gmra.mxu0 %v610
        %v682 = vpop.f32.mrf.mxu0
        %v683 = vadd.f32 0.0, %v682
        %v684 = vpop.f32.mrf.mxu0
        %v685 = vadd.f32 0.0, %v684
        %686 = vdwg.mxu0
        %v687 = vadd.f32 %v605, %v683
        %v688 = vadd.f32 %v606, %v685
        %689 = vrot.lane.b32.xlu0 %v169, 127
        %v690 = vpop.permute.xlu0 %689
        %691 = vrot.lane.b32.xlu0 %v212, 127
        %v692 = vpop.permute.xlu0 %691
        %vm693 = vcmp.lt.s32.totalorder %v171, 127
        %v694 = vsel %vm693, %v690, %v692
        %v695 = vsel %vm693, %v692, %v690
        %v696 = vsel %vm203, 1, 0
        %v697 = vsel %vm204, 1, 0
        %vm698 = vcmp.eq.s32.totalorder %v696, 1
        %vm699 = vcmp.eq.s32.totalorder %v697, 1
        %v700 = vsel %vm698, %v694, 0.0
        %v701 = vsel %vm699, %v695, 0.0
        %s702 = scalar_lea.vmem %s1, 20
        %v703 = vld [vmem:[%s702] sm:$0xf]
        %v705 = vsel %vm230, %v703, 0
        %v708 = vsel %vm234, %v700, 0
        %v711 = vsel %vm234, %v701, 0
        %713 = vmatprep.subr.mxu0 0.0
        %714 = vmatpush1.msra.mxu0 0.0
        %715 = vmatprep.subr.mxu0 0.0
        %716 = vmatpush1.msra.mxu0 0.0
        %717 = vmatprep.subr.mxu0 0.0
        %718 = vmatpush1.msra.mxu0 0.0
        %719 = vmatprep.subr.mxu0 0.0
        %720 = vmatpush1.msra.mxu0 0.0
        %721 = vmatprep.subr.mxu0 0.0
        %722 = vmatpush1.msra.mxu0 0.0
        %723 = vmatprep.subr.mxu0 0.0
        %724 = vmatpush1.msra.mxu0 0.0
        %725 = vmatprep.subr.mxu0 0.0
        %726 = vmatpush1.msra.mxu0 0.0
        %727 = vmatprep.subr.mxu0 0.0
        %728 = vmatpush1.msra.mxu0 0.0
        %729 = vmatprep.subr.mxu0 0.0
        %730 = vmatpush1.msra.mxu0 0.0
        %731 = vmatprep.subr.mxu0 0.0
        %732 = vmatpush1.msra.mxu0 0.0
        %733 = vmatprep.subr.mxu0 0.0
        %734 = vmatpush1.msra.mxu0 0.0
        %735 = vmatprep.subr.mxu0 0.0
        %736 = vmatpush1.msra.mxu0 0.0
        %737 = vmatprep.subr.mxu0 0.0
        %738 = vmatpush1.msra.mxu0 0.0
        %739 = vmatprep.subr.mxu0 0.0
        %740 = vmatpush1.msra.mxu0 0.0
        %741 = vmatprep.subr.mxu0 0.0
        %742 = vmatpush1.msra.mxu0 0.0
        %743 = vmatprep.subr.mxu0 %v711
        %744 = vmatpush1.msra.mxu0 %v708
        %745 = vmatprep.subr.mxu0 0.0
        %746 = vmatpush2.msra.mxu0 0.0
        %747 = vmatprep.subr.mxu0 0.0
        %748 = vmatpush2.msra.mxu0 0.0
        %749 = vmatprep.subr.mxu0 0.0
        %750 = vmatpush2.msra.mxu0 0.0
        %751 = vmatprep.subr.mxu0 0.0
        %752 = vmatpush2.msra.mxu0 0.0
        %753 = vmatprep.subr.mxu0 0.0
        %754 = vmatpush2.msra.mxu0 0.0
        %755 = vmatprep.subr.mxu0 0.0
        %756 = vmatpush2.msra.mxu0 0.0
        %757 = vmatprep.subr.mxu0 0.0
        %758 = vmatpush2.msra.mxu0 0.0
        %759 = vmatprep.subr.mxu0 0.0
        %760 = vmatpush2.msra.mxu0 0.0
        %761 = vmatprep.subr.mxu0 0.0
        %762 = vmatpush2.msra.mxu0 0.0
        %763 = vmatprep.subr.mxu0 0.0
        %764 = vmatpush2.msra.mxu0 0.0
        %765 = vmatprep.subr.mxu0 0.0
        %766 = vmatpush2.msra.mxu0 0.0
        %767 = vmatprep.subr.mxu0 0.0
        %768 = vmatpush2.msra.mxu0 0.0
        %769 = vmatprep.subr.mxu0 0.0
        %770 = vmatpush2.msra.mxu0 0.0
        %771 = vmatprep.subr.mxu0 0.0
        %772 = vmatpush2.msra.mxu0 0.0
        %773 = vmatprep.subr.mxu0 0.0
        %774 = vmatpush2.msra.mxu0 0.0
        %775 = vmatprep.subr.mxu0 0.0
        %776 = vmatpush2.msra.mxu0 0.0
        %777 = vmatprep.mubr.f32.mxu0 0.0
        %778 = vmatmul.mubr.f32.gmra.mxu0 %v705
        %v779 = vpop.f32.mrf.mxu0
        %v780 = vadd.f32 0.0, %v779
        %v781 = vpop.f32.mrf.mxu0
        %v782 = vadd.f32 0.0, %v781
        %783 = vdwg.mxu0
        %v784 = vadd.f32 %v687, %v780
        %v785 = vadd.f32 %v688, %v782
        %786 = vrot.lane.b32.xlu0 %v169, 113
        %v787 = vpop.permute.xlu0 %786
        %788 = vrot.lane.b32.xlu0 %v212, 113
        %v789 = vpop.permute.xlu0 %788
        %vm790 = vcmp.lt.s32.totalorder %v171, 113
        %v791 = vsel %vm790, %v787, %v789
        %v792 = vsel %vm790, %v789, %v787
        %vm793 = vmand %vm199, %vm201
        %vm794 = vmand %vm200, %vm202
        %v795 = vsel %vm793, 1, 0
        %v796 = vsel %vm794, 1, 0
        %vm797 = vcmp.eq.s32.totalorder %v795, 1
        %vm798 = vcmp.eq.s32.totalorder %v796, 1
        %v799 = vsel %vm797, %v791, 0.0
        %v800 = vsel %vm798, %v792, 0.0
        %s801 = scalar_lea.vmem %s1, 24
        %v802 = vld [vmem:[%s801] sm:$0xf]
        %v804 = vsel %vm230, %v802, 0
        %v807 = vsel %vm234, %v799, 0
        %v810 = vsel %vm234, %v800, 0
        %812 = vmatprep.subr.mxu0 0.0
        %813 = vmatpush1.msra.mxu0 0.0
        %814 = vmatprep.subr.mxu0 0.0
        %815 = vmatpush1.msra.mxu0 0.0
        %816 = vmatprep.subr.mxu0 0.0
        %817 = vmatpush1.msra.mxu0 0.0
        %818 = vmatprep.subr.mxu0 0.0
        %819 = vmatpush1.msra.mxu0 0.0
        %820 = vmatprep.subr.mxu0 0.0
        %821 = vmatpush1.msra.mxu0 0.0
        %822 = vmatprep.subr.mxu0 0.0
        %823 = vmatpush1.msra.mxu0 0.0
        %824 = vmatprep.subr.mxu0 0.0
        %825 = vmatpush1.msra.mxu0 0.0
        %826 = vmatprep.subr.mxu0 0.0
        %827 = vmatpush1.msra.mxu0 0.0
        %828 = vmatprep.subr.mxu0 0.0
        %829 = vmatpush1.msra.mxu0 0.0
        %830 = vmatprep.subr.mxu0 0.0
        %831 = vmatpush1.msra.mxu0 0.0
        %832 = vmatprep.subr.mxu0 0.0
        %833 = vmatpush1.msra.mxu0 0.0
        %834 = vmatprep.subr.mxu0 0.0
        %835 = vmatpush1.msra.mxu0 0.0
        %836 = vmatprep.subr.mxu0 0.0
        %837 = vmatpush1.msra.mxu0 0.0
        %838 = vmatprep.subr.mxu0 0.0
        %839 = vmatpush1.msra.mxu0 0.0
        %840 = vmatprep.subr.mxu0 0.0
        %841 = vmatpush1.msra.mxu0 0.0
        %842 = vmatprep.subr.mxu0 %v810
        %843 = vmatpush1.msra.mxu0 %v807
        %844 = vmatprep.subr.mxu0 0.0
        %845 = vmatpush2.msra.mxu0 0.0
        %846 = vmatprep.subr.mxu0 0.0
        %847 = vmatpush2.msra.mxu0 0.0
        %848 = vmatprep.subr.mxu0 0.0
        %849 = vmatpush2.msra.mxu0 0.0
        %850 = vmatprep.subr.mxu0 0.0
        %851 = vmatpush2.msra.mxu0 0.0
        %852 = vmatprep.subr.mxu0 0.0
        %853 = vmatpush2.msra.mxu0 0.0
        %854 = vmatprep.subr.mxu0 0.0
        %855 = vmatpush2.msra.mxu0 0.0
        %856 = vmatprep.subr.mxu0 0.0
        %857 = vmatpush2.msra.mxu0 0.0
        %858 = vmatprep.subr.mxu0 0.0
        %859 = vmatpush2.msra.mxu0 0.0
        %860 = vmatprep.subr.mxu0 0.0
        %861 = vmatpush2.msra.mxu0 0.0
        %862 = vmatprep.subr.mxu0 0.0
        %863 = vmatpush2.msra.mxu0 0.0
        %864 = vmatprep.subr.mxu0 0.0
        %865 = vmatpush2.msra.mxu0 0.0
        %866 = vmatprep.subr.mxu0 0.0
        %867 = vmatpush2.msra.mxu0 0.0
        %868 = vmatprep.subr.mxu0 0.0
        %869 = vmatpush2.msra.mxu0 0.0
        %870 = vmatprep.subr.mxu0 0.0
        %871 = vmatpush2.msra.mxu0 0.0
        %872 = vmatprep.subr.mxu0 0.0
        %873 = vmatpush2.msra.mxu0 0.0
        %874 = vmatprep.subr.mxu0 0.0
        %875 = vmatpush2.msra.mxu0 0.0
        %876 = vmatprep.mubr.f32.mxu0 0.0
        %877 = vmatmul.mubr.f32.gmra.mxu0 %v804
        %v878 = vpop.f32.mrf.mxu0
        %v879 = vadd.f32 0.0, %v878
        %v880 = vpop.f32.mrf.mxu0
        %v881 = vadd.f32 0.0, %v880
        %882 = vdwg.mxu0
        %v883 = vadd.f32 %v784, %v879
        %v884 = vadd.f32 %v785, %v881
        %885 = vrot.lane.b32.xlu0 %v169, 112
        %v886 = vpop.permute.xlu0 %885
        %887 = vrot.lane.b32.xlu0 %v212, 112
        %v888 = vpop.permute.xlu0 %887
        %vm889 = vcmp.lt.s32.totalorder %v171, 112
        %v890 = vsel %vm889, %v886, %v888
        %v891 = vsel %vm889, %v888, %v886
        %v892 = vsel %vm199, 1, 0
        %v893 = vsel %vm200, 1, 0
        %vm894 = vcmp.eq.s32.totalorder %v892, 1
        %vm895 = vcmp.eq.s32.totalorder %v893, 1
        %v896 = vsel %vm894, %v890, 0.0
        %v897 = vsel %vm895, %v891, 0.0
        %s898 = scalar_lea.vmem %s1, 28
        %v899 = vld [vmem:[%s898] sm:$0xf]
        %v901 = vsel %vm230, %v899, 0
        %v904 = vsel %vm234, %v896, 0
        %v907 = vsel %vm234, %v897, 0
        %909 = vmatprep.subr.mxu0 0.0
        %910 = vmatpush1.msra.mxu0 0.0
        %911 = vmatprep.subr.mxu0 0.0
        %912 = vmatpush1.msra.mxu0 0.0
        %913 = vmatprep.subr.mxu0 0.0
        %914 = vmatpush1.msra.mxu0 0.0
        %915 = vmatprep.subr.mxu0 0.0
        %916 = vmatpush1.msra.mxu0 0.0
        %917 = vmatprep.subr.mxu0 0.0
        %918 = vmatpush1.msra.mxu0 0.0
        %919 = vmatprep.subr.mxu0 0.0
        %920 = vmatpush1.msra.mxu0 0.0
        %921 = vmatprep.subr.mxu0 0.0
        %922 = vmatpush1.msra.mxu0 0.0
        %923 = vmatprep.subr.mxu0 0.0
        %924 = vmatpush1.msra.mxu0 0.0
        %925 = vmatprep.subr.mxu0 0.0
        %926 = vmatpush1.msra.mxu0 0.0
        %927 = vmatprep.subr.mxu0 0.0
        %928 = vmatpush1.msra.mxu0 0.0
        %929 = vmatprep.subr.mxu0 0.0
        %930 = vmatpush1.msra.mxu0 0.0
        %931 = vmatprep.subr.mxu0 0.0
        %932 = vmatpush1.msra.mxu0 0.0
        %933 = vmatprep.subr.mxu0 0.0
        %934 = vmatpush1.msra.mxu0 0.0
        %935 = vmatprep.subr.mxu0 0.0
        %936 = vmatpush1.msra.mxu0 0.0
        %937 = vmatprep.subr.mxu0 0.0
        %938 = vmatpush1.msra.mxu0 0.0
        %939 = vmatprep.subr.mxu0 %v907
        %940 = vmatpush1.msra.mxu0 %v904
        %941 = vmatprep.subr.mxu0 0.0
        %942 = vmatpush2.msra.mxu0 0.0
        %943 = vmatprep.subr.mxu0 0.0
        %944 = vmatpush2.msra.mxu0 0.0
        %945 = vmatprep.subr.mxu0 0.0
        %946 = vmatpush2.msra.mxu0 0.0
        %947 = vmatprep.subr.mxu0 0.0
        %948 = vmatpush2.msra.mxu0 0.0
        %949 = vmatprep.subr.mxu0 0.0
        %950 = vmatpush2.msra.mxu0 0.0
        %951 = vmatprep.subr.mxu0 0.0
        %952 = vmatpush2.msra.mxu0 0.0
        %953 = vmatprep.subr.mxu0 0.0
        %954 = vmatpush2.msra.mxu0 0.0
        %955 = vmatprep.subr.mxu0 0.0
        %956 = vmatpush2.msra.mxu0 0.0
        %957 = vmatprep.subr.mxu0 0.0
        %958 = vmatpush2.msra.mxu0 0.0
        %959 = vmatprep.subr.mxu0 0.0
        %960 = vmatpush2.msra.mxu0 0.0
        %961 = vmatprep.subr.mxu0 0.0
        %962 = vmatpush2.msra.mxu0 0.0
        %963 = vmatprep.subr.mxu0 0.0
        %964 = vmatpush2.msra.mxu0 0.0
        %965 = vmatprep.subr.mxu0 0.0
        %966 = vmatpush2.msra.mxu0 0.0
        %967 = vmatprep.subr.mxu0 0.0
        %968 = vmatpush2.msra.mxu0 0.0
        %969 = vmatprep.subr.mxu0 0.0
        %970 = vmatpush2.msra.mxu0 0.0
        %971 = vmatprep.subr.mxu0 0.0
        %972 = vmatpush2.msra.mxu0 0.0
        %973 = vmatprep.mubr.f32.mxu0 0.0
        %974 = vmatmul.mubr.f32.gmra.mxu0 %v901
        %v975 = vpop.f32.mrf.mxu0
        %v976 = vadd.f32 0.0, %v975
        %v977 = vpop.f32.mrf.mxu0
        %v978 = vadd.f32 0.0, %v977
        %979 = vdwg.mxu0
        %v980 = vadd.f32 %v883, %v976
        %v981 = vadd.f32 %v884, %v978
        %982 = vrot.lane.b32.xlu0 %v169, 111
        %v983 = vpop.permute.xlu0 %982
        %984 = vrot.lane.b32.xlu0 %v212, 111
        %v985 = vpop.permute.xlu0 %984
        %vm986 = vcmp.lt.s32.totalorder %v171, 111
        %v987 = vsel %vm986, %v983, %v985
        %v988 = vsel %vm986, %v985, %v983
        %vm989 = vmand %vm199, %vm203
        %vm990 = vmand %vm200, %vm204
        %v991 = vsel %vm989, 1, 0
        %v992 = vsel %vm990, 1, 0
        %vm993 = vcmp.eq.s32.totalorder %v991, 1
        %vm994 = vcmp.eq.s32.totalorder %v992, 1
        %v995 = vsel %vm993, %v987, 0.0
        %v996 = vsel %vm994, %v988, 0.0
        %s997 = scalar_lea.vmem %s1, 32
        %v998 = vld [vmem:[%s997] sm:$0xf]
        %v1000 = vsel %vm230, %v998, 0
        %v1003 = vsel %vm234, %v995, 0
        %v1006 = vsel %vm234, %v996, 0
        %1008 = vmatprep.subr.mxu0 0.0
        %1009 = vmatpush1.msra.mxu0 0.0
        %1010 = vmatprep.subr.mxu0 0.0
        %1011 = vmatpush1.msra.mxu0 0.0
        %1012 = vmatprep.subr.mxu0 0.0
        %1013 = vmatpush1.msra.mxu0 0.0
        %1014 = vmatprep.subr.mxu0 0.0
        %1015 = vmatpush1.msra.mxu0 0.0
        %1016 = vmatprep.subr.mxu0 0.0
        %1017 = vmatpush1.msra.mxu0 0.0
        %1018 = vmatprep.subr.mxu0 0.0
        %1019 = vmatpush1.msra.mxu0 0.0
        %1020 = vmatprep.subr.mxu0 0.0
        %1021 = vmatpush1.msra.mxu0 0.0
        %1022 = vmatprep.subr.mxu0 0.0
        %1023 = vmatpush1.msra.mxu0 0.0
        %1024 = vmatprep.subr.mxu0 0.0
        %1025 = vmatpush1.msra.mxu0 0.0
        %1026 = vmatprep.subr.mxu0 0.0
        %1027 = vmatpush1.msra.mxu0 0.0
        %1028 = vmatprep.subr.mxu0 0.0
        %1029 = vmatpush1.msra.mxu0 0.0
        %1030 = vmatprep.subr.mxu0 0.0
        %1031 = vmatpush1.msra.mxu0 0.0
        %1032 = vmatprep.subr.mxu0 0.0
        %1033 = vmatpush1.msra.mxu0 0.0
        %1034 = vmatprep.subr.mxu0 0.0
        %1035 = vmatpush1.msra.mxu0 0.0
        %1036 = vmatprep.subr.mxu0 0.0
        %1037 = vmatpush1.msra.mxu0 0.0
        %1038 = vmatprep.subr.mxu0 %v1006
        %1039 = vmatpush1.msra.mxu0 %v1003
        %1040 = vmatprep.subr.mxu0 0.0
        %1041 = vmatpush2.msra.mxu0 0.0
        %1042 = vmatprep.subr.mxu0 0.0
        %1043 = vmatpush2.msra.mxu0 0.0
        %1044 = vmatprep.subr.mxu0 0.0
        %1045 = vmatpush2.msra.mxu0 0.0
        %1046 = vmatprep.subr.mxu0 0.0
        %1047 = vmatpush2.msra.mxu0 0.0
        %1048 = vmatprep.subr.mxu0 0.0
        %1049 = vmatpush2.msra.mxu0 0.0
        %1050 = vmatprep.subr.mxu0 0.0
        %1051 = vmatpush2.msra.mxu0 0.0
        %1052 = vmatprep.subr.mxu0 0.0
        %1053 = vmatpush2.msra.mxu0 0.0
        %1054 = vmatprep.subr.mxu0 0.0
        %1055 = vmatpush2.msra.mxu0 0.0
        %1056 = vmatprep.subr.mxu0 0.0
        %1057 = vmatpush2.msra.mxu0 0.0
        %1058 = vmatprep.subr.mxu0 0.0
        %1059 = vmatpush2.msra.mxu0 0.0
        %1060 = vmatprep.subr.mxu0 0.0
        %1061 = vmatpush2.msra.mxu0 0.0
        %1062 = vmatprep.subr.mxu0 0.0
        %1063 = vmatpush2.msra.mxu0 0.0
        %1064 = vmatprep.subr.mxu0 0.0
        %1065 = vmatpush2.msra.mxu0 0.0
        %1066 = vmatprep.subr.mxu0 0.0
        %1067 = vmatpush2.msra.mxu0 0.0
        %1068 = vmatprep.subr.mxu0 0.0
        %1069 = vmatpush2.msra.mxu0 0.0
        %1070 = vmatprep.subr.mxu0 0.0
        %1071 = vmatpush2.msra.mxu0 0.0
        %1072 = vmatprep.mubr.f32.mxu0 0.0
        %1073 = vmatmul.mubr.f32.gmra.mxu0 %v1000
        %v1074 = vpop.f32.mrf.mxu0
        %v1075 = vadd.f32 0.0, %v1074
        %v1076 = vpop.f32.mrf.mxu0
        %v1077 = vadd.f32 0.0, %v1076
        %1078 = vdwg.mxu0
        %v1079 = vadd.f32 %v980, %v1075
        %v1080 = vadd.f32 %v981, %v1077
        %v1081 = vxor.u32 %v1079, 2147483648
        %v1082 = vxor.u32 %v1080, 2147483648
        %v1083 = vmul.f32 %v1081, 1.442695
        %v1084 = vpow.pop %v1083
        %v1085 = vmul.f32 %v1082, 1.442695
        %v1086 = vpow.pop %v1085
        %v1087 = vadd.f32 %v1084, 1.0
        %v1088 = vadd.f32 %v1086, 1.0
        %v1089 = vrcp.pop %v1087
        %v1090 = vmul.f32 1.0, %v1089
        %v1091 = vrcp.pop %v1088
        %v1092 = vmul.f32 1.0, %v1091
        %v1093 = vmul.f32 %v1079, %v1090
        %v1094 = vmul.f32 %v1080, %v1092
        %v1097 = vcombine.low %v1093, %v1094
        %1099 = vst [vmem:[%s163] sm:$0xff] %v1097
        %s1100 = sand.u32 %s93, 1
        %s1101 = scalar_lea.sflag [#allocation3], %s1100
        %s1102 = sand.u32 %s93, 1
        %s1103 = smul.addr %s1102, 8
        %s1104 = scalar_lea.vmem [#allocation2], %s1103
        // Predicated region
        $region33: #{tpu_custom_call.1} parent=31 // pred_check
          %p1105 = pneg %p103
        $region34: #{tpu_custom_call.1} parent=31 // pred_check_branch
          %1107 = sbr.rel (%p1105) target = $region36
        $region35: #{tpu_custom_call.1} parent=31 // pred_region
          %s1109 = ssub.s32 128, 128
          %1110 = vsyncadd %s1101, %s1109
          %s1111 = smul.addr %s17, 2
          %s1112 = smul.addr %s1111, 64
          %s1113 = scalar_lea.hbm %s3, %s1112
          %s1115 = sshll.u32 %s1104, 4
          %s1116 = int_to_ptr.vmem [resolvable:$true] %s1115
          %1118 = dma.vmem_to_hbm [thread:$0]  %s1116, 128, %s1113, %s1101
        $region36: #{tpu_custom_call.1} parent=31 // pred_fallthru
          _
      $region32: #{tpu_custom_call.1} parent=5 // pred_fallthru
        _
      %p1119 = scmp.le.s32.totalorder 2, %s12
      // Predicated region
      $region37: #{tpu_custom_call.1} parent=5 // pred_check
        %p1120 = pneg %p1119
      $region38: #{tpu_custom_call.1} parent=5 // pred_check_branch
        %1122 = sbr.rel (%p1120) target = $region40
      $region39: #{tpu_custom_call.1} parent=5 // pred_region
        %s1123 = ssub.s32 %s12, 2
        // Predicated region
        $region41: #{tpu_custom_call.1} parent=39 // pred_check
          %p1124 = pneg %p109
        $region42: #{tpu_custom_call.1} parent=39 // pred_check_branch
          %1126 = sbr.rel (%p1124) target = $region44
        $region43: #{tpu_custom_call.1} parent=39 // pred_region
          %s1127 = sand.u32 %s94, 1
          %s1128 = scalar_lea.sflag [#allocation3], %s1127
          %s1129 = sand.u32 %s94, 1
          %s1130 = smul.addr %s1129, 8
          %s1131 = scalar_lea.vmem [#allocation2], %s1130
          %1132 = dma.done %s1128, 128
        $region44: #{tpu_custom_call.1} parent=39 // pred_fallthru
          _
      $region40: #{tpu_custom_call.1} parent=5 // pred_fallthru
        _
    $region6: #{tpu_custom_call.1} parent=1 // loop_footer
      %s16 = sadd.s32 1, %s12
    $region7: #{tpu_custom_call.1} parent=1 // loop_footer_branch
      %11 = sbr.rel target = $region3
    $region8: #{tpu_custom_call.1} parent=1 // loop_exit
      _
    %1133 = vsyncpa [#allocation3], 1
    %s1134 = scalar_lea.sflag [#allocation3], 1
    %1135 = vsyncpa %s1134, 1

</llo_original>
